<compile_context>
chip_gen: v7x
topology: tpu7x:2x2x1
jax: 0.10.0
libtpu: 0.0.40
codegen_flags: <defaults>
</compile_context>

<pallas_src>
import functools

import jax
import jax.numpy as jnp
from jax.experimental import pallas as pl
from jax.experimental.pallas import tpu as pltpu


def _round_up(x, m):
    return (x + m - 1) // m * m


def _pick_tile(m, requested):
    tm = max(8, min(_round_up(requested, 8), _round_up(m, 8)))
    # keep at least 2 row tiles when possible (v7x has 2 TensorCores/chip);
    # with the K-tiled table stream this no longer blows the VMEM budget.
    if m > 8 and -(-m // tm) < 2:
        tm = max(8, _round_up(-(-m // 2), 8))
    return tm


def _vmem_budget():
    """Device-aware VMEM cap with headroom for compiler-internal scratch."""
    cap = 64 << 20
    try:
        info = pltpu.get_tpu_info()
        cap = int(getattr(info, "vmem_capacity_bytes", cap))
    except Exception:
        pass
    return int(max(32 << 20, min(cap - (16 << 20), 100 << 20)))


def _phase_embed_kernel(idx_ref, tab_ref, out_ref, *, tk):
    # idx_ref : [tm, 1]  int32  local (per-phase) row index; padding rows = -1
    # tab_ref : [tk, D]  f32    vocab chunk c of phase p's embedding table
    # out_ref : [tm, D]  f32    accumulator (revisited across phase & chunk)
    p = pl.program_id(1)
    c = pl.program_id(2)

    @pl.when((p == 0) & (c == 0))
    def _():
        out_ref[...] = jnp.zeros_like(out_ref)

    tm = idx_ref.shape[0]
    # lane ids of this vocab chunk; one compare per (phase, chunk) step
    col = jax.lax.broadcasted_iota(jnp.int32, (tm, tk), 1) + c * tk
    onehot = (col == idx_ref[...]).astype(jnp.float32)          # [tm, tk]

    # MXU push at HIGHEST precision so the selected f32 rows are exact
    # (default precision would truncate table values to ~bf16).
    out_ref[...] += jnp.dot(onehot, tab_ref[...],
                            preferred_element_type=jnp.float32,
                            precision=jax.lax.Precision.HIGHEST)


def phase_embedding(phase, tables, *, tm=512, tk=None):
    """phase: [B, S, P] int; tables: [P, N, D] f32 -> [B, S, D] f32.

    Precondition (same as nn.Embedding): phase[..., i] in [0, num_embeddings_i).
    """
    B, S, P = phase.shape
    P2, N, D = tables.shape
    assert P2 == P

    M = B * S
    tm = _pick_tile(M, tm)
    M_pad = _round_up(M, tm)

    # Vocab chunking: small vocabularies stay as a single full-extent chunk
    # (no per-call table repacking at all); large ones stream in MXU-friendly
    # chunks.  TODO(synk): pre-pack the padded table once at init for large N.
    if tk is None:
        tk = N if N <= 1024 else 512
    if tk >= N:
        tk, N_pad, tab3 = N, N, tables
    else:
        tk = _round_up(tk, 8)
        N_pad = _round_up(N, tk)
        tab3 = jnp.pad(tables, ((0, 0), (0, N_pad - N), (0, 0)))
    nc = N_pad // tk

    # Per-phase LOCAL indices, laid out [P, M_pad, 1] so each grid step gets a
    # [tm, 1] sublane-aligned block.  Padding rows hold -1 (match nothing).
    idx = phase.reshape(M, P).astype(jnp.int32)
    idx = jnp.pad(idx, ((0, M_pad - M), (0, 0)), constant_values=-1)
    idx3 = jnp.transpose(idx)[:, :, None]                        # [P, M_pad, 1]

    cost = pl.CostEstimate(
        flops=2 * M_pad * P * N_pad * D,
        transcendentals=0,
        bytes_accessed=int(tab3.size * 4 + idx3.size * 4 + M_pad * D * 4))

    out = pl.pallas_call(
        functools.partial(_phase_embed_kernel, tk=tk),
        out_shape=jax.ShapeDtypeStruct((M_pad, D), jnp.float32),
        grid_spec=pltpu.PrefetchScalarGridSpec(
            num_scalar_prefetch=0,
            grid=(M_pad // tm, P, nc),
            in_specs=[
                # index tile: depends on row tile i and phase p
                pl.BlockSpec((None, tm, 1), lambda i, p, c: (p, i, 0)),
                # table chunk: depends on phase p and vocab chunk c (streamed)
                pl.BlockSpec((None, tk, D), lambda i, p, c: (p, c, 0)),
            ],
            # output block revisited across the two reduction axes
            out_specs=pl.BlockSpec((tm, D), lambda i, p, c: (i, 0)),
        ),
        compiler_params=pltpu.CompilerParams(
            dimension_semantics=("parallel", "arbitrary", "arbitrary"),
            vmem_limit_bytes=_vmem_budget()),
        cost_estimate=cost,
    )(idx3, tab3)

    out = out[:M] if M_pad != M else out
    return out.reshape(B, S, D)


def make_tables(phase_list, embed_dim, key):
    """Deterministic N(0,1) init like nn.Embedding; zero-pad to common vocab."""
    n_pad = _round_up(max(phase_list), 8)
    tabs = []
    for i, num in enumerate(phase_list):
        k = jax.random.fold_in(key, i)
        w = jax.random.normal(k, (num, embed_dim), dtype=jnp.float32)
        w = jnp.pad(w, ((0, n_pad - num), (0, 0)))
        tabs.append(w)
    return jnp.stack(tabs, axis=0)  # [P, N_pad, D]


if __name__ == "__main__":
    B, S = 2, 8
    phase_list = [5, 7, 9]
    embed_dim = 32
    P = len(phase_list)

    key = jax.random.PRNGKey(0)
    k_tab, k_idx = jax.random.split(key)

    tables = make_tables(phase_list, embed_dim, k_tab)

    # integer phase indices, each column i in [0, phase_list[i])
    cols = []
    for i, num in enumerate(phase_list):
        ki = jax.random.fold_in(k_idx, i)
        cols.append(jax.random.randint(ki, (B, S, 1), 0, num, dtype=jnp.int32))
    phase = jnp.concatenate(cols, axis=-1)  # [B, S, P]

    out = phase_embedding(phase, tables)
    out = jax.block_until_ready(out)

    # reference: sum of gathers (pure JAX) -- matches torch semantics
    ref = jnp.zeros((B, S, embed_dim), jnp.float32)
    for i in range(P):
        ref = ref + tables[i][phase[:, :, i]]
    assert out.shape == (B, S, embed_dim)
    assert jnp.allclose(out, ref, atol=1e-5, rtol=1e-5)

    print("KERNEL_OK")
</pallas_src>

<mosaic_0001>
module attributes {stable_mosaic.version = 11 : i64} {
  func.func @_phase_embed_kernel(%arg0: i32, %arg1: i32, %arg2: i32, %arg3: memref<1x8x1xi32, #tpu.memory_space<vmem>>, %arg4: memref<1x16x32xf32, #tpu.memory_space<vmem>>, %arg5: memref<8x32xf32, #tpu.memory_space<vmem>>) attributes {dimension_semantics = [#tpu.dimension_semantics<parallel>, #tpu.dimension_semantics<arbitrary>, #tpu.dimension_semantics<arbitrary>], iteration_bounds = array<i64: 2, 3, 1>, scalar_prefetch = 0 : i64, scratch_operands = 0 : i64, tpu.core_type = #tpu.core_type<tc>, window_params = [{transform_indices = @transform_0, window_bounds = array<i64: 1, 8, 1>}, {transform_indices = @transform_1, window_bounds = array<i64: 1, 16, 32>}, {transform_indices = @transform_2, window_bounds = array<i64: 8, 32>}]} {
    %c0_i32 = arith.constant 0 : i32
    %0 = arith.cmpi eq, %arg1, %c0_i32 : i32
    %c0_i32_0 = arith.constant 0 : i32
    %1 = arith.cmpi eq, %arg2, %c0_i32_0 : i32
    %2 = arith.andi %0, %1 : i1
    %3 = arith.extui %2 : i1 to i32
    %c0_i32_1 = arith.constant 0 : i32
    %4 = arith.cmpi ne, %3, %c0_i32_1 : i32
    scf.if %4 {
      %cst_11 = arith.constant 0.000000e+00 : f32
      %21 = vector.broadcast %cst_11 : f32 to vector<8x32xf32>
      %c0_12 = arith.constant 0 : index
      %c0_13 = arith.constant 0 : index
      %22 = vector.load %arg5[%c0_12, %c0_13] : memref<8x32xf32, #tpu.memory_space<vmem>>, vector<8x32xf32>
      tpu.vector_store %arg5[%c0_12, %c0_13], %21 {strides = array<i32>} : memref<8x32xf32, #tpu.memory_space<vmem>>, vector<8x32xf32>,
    } else {
    }
    %5 = tpu.iota {dimensions = array<i32: 1>} : vector<8x16xi32>
    %c16_i32 = arith.constant 16 : i32
    %6 = arith.muli %arg2, %c16_i32 : i32
    %7 = vector.broadcast %6 : i32 to vector<8x16xi32>
    %8 = arith.addi %5, %7 : vector<8x16xi32>
    %c0 = arith.constant 0 : index
    %c0_2 = arith.constant 0 : index
    %c0_3 = arith.constant 0 : index
    %9 = vector.load %arg3[%c0, %c0_2, %c0_3] : memref<1x8x1xi32, #tpu.memory_space<vmem>>, vector<1x8x1xi32>
    %10 = vector.shape_cast %9 : vector<1x8x1xi32> to vector<8x1xi32>
    %11 = vector.broadcast %10 : vector<8x1xi32> to vector<8x16xi32>
    %12 = arith.cmpi eq, %8, %11 : vector<8x16xi32>
    %13 = arith.extui %12 : vector<8x16xi1> to vector<8x16xi32>
    %14 = arith.sitofp %13 : vector<8x16xi32> to vector<8x16xf32>
    %c0_4 = arith.constant 0 : index
    %c0_5 = arith.constant 0 : index
    %15 = vector.load %arg5[%c0_4, %c0_5] : memref<8x32xf32, #tpu.memory_space<vmem>>, vector<8x32xf32>
    %c0_6 = arith.constant 0 : index
    %c0_7 = arith.constant 0 : index
    %c0_8 = arith.constant 0 : index
    %16 = vector.load %arg4[%c0_6, %c0_7, %c0_8] : memref<1x16x32xf32, #tpu.memory_space<vmem>>, vector<1x16x32xf32>
    %17 = vector.shape_cast %16 : vector<1x16x32xf32> to vector<16x32xf32>
    %cst = arith.constant dense<0.000000e+00> : vector<8x32xf32>
    %18 = tpu.matmul %14, %17, %cst {dimension_numbers = #tpu.dot_dimension_numbers<[1], [0], [0], [1], [0, 0, 1, 1], [], []>, precision = #tpu.contract_precision<fp32>} : vector<8x16xf32>, vector<16x32xf32>, vector<8x32xf32> -> vector<8x32xf32>
    %19 = arith.addf %15, %18 : vector<8x32xf32>
    %c0_9 = arith.constant 0 : index
    %c0_10 = arith.constant 0 : index
    %20 = vector.load %arg5[%c0_9, %c0_10] : memref<8x32xf32, #tpu.memory_space<vmem>>, vector<8x32xf32>
    tpu.vector_store %arg5[%c0_9, %c0_10], %19 {strides = array<i32>} : memref<8x32xf32, #tpu.memory_space<vmem>>, vector<8x32xf32>,
    return
  }
  func.func @transform_0(%arg0: i32, %arg1: i32, %arg2: i32) -> (i32, i32, i32) {
    %c0_i32 = arith.constant 0 : i32
    %c0_i32_0 = arith.constant 0 : i32
    return %arg1, %arg0, %c0_i32 : i32, i32, i32
  }
  func.func @transform_1(%arg0: i32, %arg1: i32, %arg2: i32) -> (i32, i32, i32) {
    %c0_i32 = arith.constant 0 : i32
    %c0_i32_0 = arith.constant 0 : i32
    return %arg1, %arg2, %c0_i32 : i32, i32, i32
  }
  func.func @transform_2(%arg0: i32, %arg1: i32, %arg2: i32) -> (i32, i32) {
    %c0_i32 = arith.constant 0 : i32
    %c0_i32_0 = arith.constant 0 : i32
    return %arg0, %c0_i32 : i32, i32
  }
}

</mosaic_0001>

<llo_original>
// kernel: tpu_custom_call.1
$region0: #{tpu_custom_call.1}
  #allocation0 [shape = 'u32[]', space=smem, size = 0x4, offset = 0x4, fixed_abs, tag = 'smem constant byte address 0x4 - core index']
  #allocation1 [shape = 'u32[144,128]{1,0:T(1,128)}', space=vmem, size = 0x12000, scoped, tag = 'internal scratch']
  %s0 = inlined_call_operand.vmem [shape: s32[3,16,1], index: 0, kind: input, shape index: {}]
  %s1 = inlined_call_operand.vmem [shape: f32[3,16,32], index: 1, kind: input, shape index: {}]
  %s2 = inlined_call_operand.hbm [shape: f32[16,32], index: 2, kind: output, shape index: {}]
  %s3 = sld [smem:[#allocation0]]
  $region45: #{tpu_custom_call.1} parent=0
    _
  %s5 = ssub.s32 1, %s3
  %s6 = scalar_select 0, %s5, %s3
  $region1: #{tpu_custom_call.1} parent=0
    #allocation2 [shape = 'u8[8192]{0}', space=vmem, size = 0x2000, scoped, tag = 'output window, operand 0']
    #allocation3 [shape = 's32[2]{0}', space=sflag, size = 0x8, scoped, tag = 'scoped memory for tpu_custom_call.1']
    %7 = vsyncpa [#allocation3], 0
    %s8 = scalar_lea.sflag [#allocation3], 1
    %9 = vsyncpa %s8, 0
    loop: start=0, step=1, limit=8
    $region2: #{tpu_custom_call.1} parent=1 // loop_pre_header
      _
    $region3: #{tpu_custom_call.1} parent=1 // loop_header
      %s11 = sphi 0, %s15
      %p12 = scmp.ge.s32.totalorder %s11, 8
      %s18 = sphi 0, %s37
      %s19 = sphi 0, %s33
      %s20 = sphi 0, %s29
      %s21 = sphi 0, %s18
      %s22 = sphi 0, %s19
      %s23 = sphi 0, %s20
      %s24 = sphi 0, %s21
      %s25 = sphi 0, %s22
      %s26 = sphi 0, %s23
      %s42 = sphi 0, %s44
      %s45 = sphi 0, %s42
      %s46 = sphi 0, %s45
      %s62 = sphi 0, %s46
      %s70 = sphi 0, %s72
      %s73 = sphi 0, %s70
      %s74 = sphi 0, %s73
      %s90 = sphi 0, %s74
      %s96 = sphi 0, %s98
      %s99 = sphi 0, %s96
      %s100 = sphi 0, %s99
      %s116 = sphi 0, %s100
    $region4: #{tpu_custom_call.1} parent=1 // loop_header_branch
      %14 = sbr.rel (%p12) target = $region8
    $region5: #{tpu_custom_call.1} parent=1 // loop_body
      %s16 = ssub.s32 %s11, 1
      %s17 = ssub.s32 %s11, 2
      %s27 = sadd.s32 1, %s20
      %p28 = scmp.ge.s32.totalorder %s27, 1
      %s29 = scalar_select %p28, 0, %s27
      %s30 = sadd.s32 1, %s19
      %s31 = scalar_select %p28, %s30, %s19
      %p32 = scmp.ge.s32.totalorder %s31, 3
      %s33 = scalar_select %p32, 0, %s31
      %s34 = sadd.s32 1, %s18
      %s35 = scalar_select %p32, %s34, %s18
      %p36 = scmp.ge.s32.totalorder %s35, 2
      %s37 = scalar_select %p36, 0, %s35
      %s38 = ssub.s32 %s19, %s33
      %s39 = ssub.s32 %s18, %s37
      %s40 = sor.u32 %s38, %s39
      %p41 = scmp.eq.s32.totalorder %s40, 0
      %s43 = sadd.s32 %s42, 1
      %s44 = scalar_select %p41, %s42, %s43
      %p47 = pneg %p41
      %p48 = scmp.eq.s32.totalorder %s11, 5
      %p49 = por %p47, %p48
      %p50 = scmp.ne.s32.totalorder %s42, %s45
      %p51 = scmp.eq.s32.totalorder %s11, 0
      %p52 = por %p50, %p51
      %p53 = scmp.ne.s32.totalorder %s42, %s45
      %p54 = scmp.eq.s32.totalorder %s16, 5
      %p55 = por %p53, %p54
      %p56 = scmp.ne.s32.totalorder %s45, %s46
      %p57 = scmp.eq.s32.totalorder %s16, 0
      %p58 = por %p56, %p57
      %p59 = scmp.ne.s32.totalorder %s45, %s46
      %p60 = scmp.eq.s32.totalorder %s17, 5
      %p61 = por %p59, %p60
      %p63 = scmp.ne.s32.totalorder %s46, %s62
      %p64 = scmp.eq.s32.totalorder %s17, 0
      %p65 = por %p63, %p64
      %s66 = ssub.s32 %s19, %s33
      %s67 = ssub.s32 %s20, %s29
      %s68 = sor.u32 %s66, %s67
      %p69 = scmp.eq.s32.totalorder %s68, 0
      %s71 = sadd.s32 %s70, 1
      %s72 = scalar_select %p69, %s70, %s71
      %p75 = pneg %p69
      %p76 = scmp.eq.s32.totalorder %s11, 5
      %p77 = por %p75, %p76
      %p78 = scmp.ne.s32.totalorder %s70, %s73
      %p79 = scmp.eq.s32.totalorder %s11, 0
      %p80 = por %p78, %p79
      %p81 = scmp.ne.s32.totalorder %s70, %s73
      %p82 = scmp.eq.s32.totalorder %s16, 5
      %p83 = por %p81, %p82
      %p84 = scmp.ne.s32.totalorder %s73, %s74
      %p85 = scmp.eq.s32.totalorder %s16, 0
      %p86 = por %p84, %p85
      %p87 = scmp.ne.s32.totalorder %s73, %s74
      %p88 = scmp.eq.s32.totalorder %s17, 5
      %p89 = por %p87, %p88
      %p91 = scmp.ne.s32.totalorder %s74, %s90
      %p92 = scmp.eq.s32.totalorder %s17, 0
      %p93 = por %p91, %p92
      %s94 = ssub.s32 %s18, %s37
      %p95 = scmp.eq.s32.totalorder %s94, 0
      %s97 = sadd.s32 %s96, 1
      %s98 = scalar_select %p95, %s96, %s97
      %p101 = pneg %p95
      %p102 = scmp.eq.s32.totalorder %s11, 5
      %p103 = por %p101, %p102
      %p104 = scmp.ne.s32.totalorder %s96, %s99
      %p105 = scmp.eq.s32.totalorder %s11, 0
      %p106 = por %p104, %p105
      %p107 = scmp.ne.s32.totalorder %s96, %s99
      %p108 = scmp.eq.s32.totalorder %s16, 5
      %p109 = por %p107, %p108
      %p110 = scmp.ne.s32.totalorder %s99, %s100
      %p111 = scmp.eq.s32.totalorder %s16, 0
      %p112 = por %p110, %p111
      %p113 = scmp.ne.s32.totalorder %s99, %s100
      %p114 = scmp.eq.s32.totalorder %s17, 5
      %p115 = por %p113, %p114
      %p117 = scmp.ne.s32.totalorder %s100, %s116
      %p118 = scmp.eq.s32.totalorder %s17, 0
      %p119 = por %p117, %p118
      %p120 = scmp.le.s32.totalorder 1, %s11
      %p121 = scmp.lt.s32.totalorder %s11, 7
      %p122 = pnand %p120, %p121
      %p123 = pneg %p122
      // Predicated region
      $region9: #{tpu_custom_call.1} parent=5 // pred_check
        _
      $region10: #{tpu_custom_call.1} parent=5 // pred_check_branch
        %125 = sbr.rel (%p122) target = $region12
      $region11: #{tpu_custom_call.1} parent=5 // pred_region
        %s126 = ssub.s32 %s11, 1
      $region12: #{tpu_custom_call.1} parent=5 // pred_fallthru
        _
      %p127 = scmp.lt.s32.totalorder %s11, 6
      // Predicated region
      $region13: #{tpu_custom_call.1} parent=5 // pred_check
        %p128 = pneg %p127
      $region14: #{tpu_custom_call.1} parent=5 // pred_check_branch
        %130 = sbr.rel (%p128) target = $region16
      $region15: #{tpu_custom_call.1} parent=5 // pred_region
        // Predicated region
        $region17: #{tpu_custom_call.1} parent=15 // pred_check
          %p131 = pneg %p52
        $region18: #{tpu_custom_call.1} parent=15 // pred_check_branch
          %133 = sbr.rel (%p131) target = $region20
        $region19: #{tpu_custom_call.1} parent=15 // pred_region
          %p134 = scmp.lt.s32.totalorder %s19, 2
          %s135 = scalar_select %p134, %s19, 2
          %p136 = scmp.lt.s32.totalorder %s18, 1
          %s137 = scalar_select %p136, %s18, 1
          %s138 = smul.addr %s135, 2
          %s139 = sadd.s32 %s137, %s138
          %s140 = smul.addr %s139, 8
          %s141 = scalar_lea.vmem %s0, %s140
        $region20: #{tpu_custom_call.1} parent=15 // pred_fallthru
          _
        // Predicated region
        $region21: #{tpu_custom_call.1} parent=15 // pred_check
          %p142 = pneg %p80
        $region22: #{tpu_custom_call.1} parent=15 // pred_check_branch
          %144 = sbr.rel (%p142) target = $region24
        $region23: #{tpu_custom_call.1} parent=15 // pred_region
          %s145 = smul.u32 2, %s20
          %p146 = scmp.lt.s32.totalorder %s19, 2
          %s147 = scalar_select %p146, %s19, 2
          %p148 = scmp.lt.s32.totalorder %s145, 1
          %s149 = scalar_select %p148, %s145, 1
          %s150 = smul.addr %s147, 2
          %s151 = sadd.s32 %s149, %s150
          %s152 = smul.addr %s151, 8
          %s153 = scalar_lea.vmem %s1, %s152
          %s154 = smul.u32 2, %s20
        $region24: #{tpu_custom_call.1} parent=15 // pred_fallthru
          _
      $region16: #{tpu_custom_call.1} parent=5 // pred_fallthru
        _
      %p155 = scmp.le.s32.totalorder 1, %s11
      %p156 = scmp.lt.s32.totalorder %s11, 7
      %p157 = pnand %p155, %p156
      %p158 = pneg %p157
      // Predicated region
      $region25: #{tpu_custom_call.1} parent=5 // pred_check
        _
      $region26: #{tpu_custom_call.1} parent=5 // pred_check_branch
        %160 = sbr.rel (%p157) target = $region28
      $region27: #{tpu_custom_call.1} parent=5 // pred_region
        %s161 = ssub.s32 %s11, 1
        %p162 = scmp.lt.s32.totalorder %s22, 2
        %s163 = scalar_select %p162, %s22, 2
        %p164 = scmp.lt.s32.totalorder %s21, 1
        %s165 = scalar_select %p164, %s21, 1
        %s166 = smul.addr %s163, 2
        %s167 = sadd.s32 %s165, %s166
        %s168 = smul.addr %s167, 8
        %s169 = scalar_lea.vmem %s0, %s168
        %p170 = pneg %p58
        %p171 = pneg %p55
        %s172 = smul.u32 2, %s23
        %p173 = scmp.lt.s32.totalorder %s22, 2
        %s174 = scalar_select %p173, %s22, 2
        %p175 = scmp.lt.s32.totalorder %s172, 1
        %s176 = scalar_select %p175, %s172, 1
        %s177 = smul.addr %s174, 2
        %s178 = sadd.s32 %s176, %s177
        %s179 = smul.addr %s178, 8
        %s180 = scalar_lea.vmem %s1, %s179
        %p181 = pneg %p86
        %p182 = pneg %p83
        %p183 = pneg %p112
        %p184 = pneg %p109
        %s185 = sand.u32 %s99, 1
        %s186 = scalar_lea.sflag [#allocation3], %s185
        %s187 = sand.u32 %s99, 1
        %s188 = smul.addr %s187, 8
        %s189 = scalar_lea.vmem [#allocation2], %s188
        %p190 = scmp.lt.s32.totalorder %s22, 2
        %s191 = scalar_select %p190, %s22, 2
        %p192 = scmp.lt.s32.totalorder %s21, 1
        %s193 = scalar_select %p192, %s21, 1
        %s194 = smul.addr %s191, 2
        %s195 = sadd.s32 %s193, %s194
        %s196 = smul.addr %s195, 8
        %s197 = scalar_lea.vmem %s0, %s196
        %s198 = smul.u32 2, %s23
        %p199 = scmp.lt.s32.totalorder %s22, 2
        %s200 = scalar_select %p199, %s22, 2
        %p201 = scmp.lt.s32.totalorder %s198, 1
        %s202 = scalar_select %p201, %s198, 1
        %s203 = smul.addr %s200, 2
        %s204 = sadd.s32 %s202, %s203
        %s205 = smul.addr %s204, 8
        %s206 = scalar_lea.vmem %s1, %s205
        %s207 = smul.u32 2, %s23
        %p208 = scmp.eq.s32.totalorder %s22, 0
        %p209 = scmp.eq.s32.totalorder %s23, 0
        %p210 = pnand %p208, %p209
        %p211 = pneg %p210
        // Predicated region
        $region29: #{tpu_custom_call.1} parent=27 // pred_check
          _
        $region30: #{tpu_custom_call.1} parent=27 // pred_check_branch
          %213 = sbr.rel (%p210) target = $region32
        $region31: #{tpu_custom_call.1} parent=27 // pred_region
          %vm214 = vcmask 261120
          %215 = vst.msk [vmem:[%s189] sm:$0xff] %vm214, 0.0
        $region32: #{tpu_custom_call.1} parent=27 // pred_fallthru
          _
        %v216 = vlaneseq
        %v217 = vand.u32 %v216, 127
        %s218 = smul.u32 %s23, 16
        %v219 = vstv %s218
        %v220 = vadd.s32 %v217, %v219
        %v221 = vld [vmem:[%s197] sm:$0xff]
        %222 = vset.pattern.permute.xlu0 0
        %223 = vperm.xlu0 %222, %v221
        %v224 = vpop.permute.xlu0 %223
        %vm225 = vcmp.eq.s32.totalorder %v220, %v224
        %v226 = vsel %vm225, 1, 0
        %v227 = vcvt.s32.f32 %v226
        %v228 = vld [vmem:[%s189] sm:$0xff]
        %v229 = vld [vmem:[%s206] sm:$0xff]
        %v230 = vld [vmem:[%s206 + $0x8] sm:$0xff]
        %vm231 = vcmask 130048
        %v233 = vsel %vm231, %v227, 0
        %235 = vmatprep.subr.mxu0 0.0
        %v236 = vand.u32 %v229, 4294901760
        %237 = vmatpush1.msra.mxu0 %v236
        %238 = vmatprep.subr.mxu0 0.0
        %v239 = vand.u32 %v230, 4294901760
        %240 = vmatpush1.msra.mxu0 %v239
        %241 = vmatprep.subr.mxu0 0.0
        %242 = vmatpush1.msra.mxu0 0.0
        %243 = vmatprep.subr.mxu0 0.0
        %244 = vmatpush1.msra.mxu0 0.0
        %245 = vmatprep.subr.mxu0 0.0
        %246 = vmatpush1.msra.mxu0 0.0
        %247 = vmatprep.subr.mxu0 0.0
        %248 = vmatpush1.msra.mxu0 0.0
        %249 = vmatprep.subr.mxu0 0.0
        %250 = vmatpush1.msra.mxu0 0.0
        %251 = vmatprep.subr.mxu0 0.0
        %252 = vmatpush1.msra.mxu0 0.0
        %253 = vmatprep.subr.mxu0 0.0
        %254 = vmatpush1.msra.mxu0 0.0
        %255 = vmatprep.subr.mxu0 0.0
        %256 = vmatpush1.msra.mxu0 0.0
        %257 = vmatprep.subr.mxu0 0.0
        %258 = vmatpush1.msra.mxu0 0.0
        %259 = vmatprep.subr.mxu0 0.0
        %260 = vmatpush1.msra.mxu0 0.0
        %261 = vmatprep.subr.mxu0 0.0
        %262 = vmatpush1.msra.mxu0 0.0
        %263 = vmatprep.subr.mxu0 0.0
        %264 = vmatpush1.msra.mxu0 0.0
        %265 = vmatprep.subr.mxu0 0.0
        %266 = vmatpush1.msra.mxu0 0.0
        %267 = vmatprep.subr.mxu0 0.0
        %268 = vmatpush1.msra.mxu0 0.0
        %269 = vmatprep.subr.mxu0 0.0
        %270 = vmatpush1.msra.mxu0 0.0
        %271 = vmatprep.subr.mxu0 0.0
        %272 = vmatpush1.msra.mxu0 0.0
        %273 = vmatprep.subr.mxu0 0.0
        %274 = vmatpush1.msra.mxu0 0.0
        %275 = vmatprep.subr.mxu0 0.0
        %276 = vmatpush1.msra.mxu0 0.0
        %277 = vmatprep.subr.mxu0 0.0
        %278 = vmatpush1.msra.mxu0 0.0
        %279 = vmatprep.subr.mxu0 0.0
        %280 = vmatpush1.msra.mxu0 0.0
        %281 = vmatprep.subr.mxu0 0.0
        %282 = vmatpush1.msra.mxu0 0.0
        %283 = vmatprep.subr.mxu0 0.0
        %284 = vmatpush1.msra.mxu0 0.0
        %285 = vmatprep.subr.mxu0 0.0
        %286 = vmatpush1.msra.mxu0 0.0
        %287 = vmatprep.subr.mxu0 0.0
        %288 = vmatpush1.msra.mxu0 0.0
        %289 = vmatprep.subr.mxu0 0.0
        %290 = vmatpush1.msra.mxu0 0.0
        %291 = vmatprep.subr.mxu0 0.0
        %292 = vmatpush1.msra.mxu0 0.0
        %293 = vmatprep.subr.mxu0 0.0
        %294 = vmatpush1.msra.mxu0 0.0
        %295 = vmatprep.subr.mxu0 0.0
        %296 = vmatpush1.msra.mxu0 0.0
        %297 = vmatprep.subr.mxu0 0.0
        %298 = vmatpush1.msra.mxu0 0.0
        %299 = vmatprep.subr.mxu0 0.0
        %300 = vmatpush1.msra.mxu0 0.0
        %301 = vmatprep.mubr.f32.mxu0 0.0
        %v302 = vand.u32 %v233, 4294901760
        %v303 = vsub.f32 %v233, %v302
        %v304 = vand.u32 %v303, 4294901760
        %v305 = vsub.f32 %v303, %v304
        %v306 = vand.u32 %v305, 4294901760
        %307 = vmatmul.mubr.f32.gmra.mrb[0].mxu0 %v306
        %v308 = vpop.f32.mrb[0].mxu0
        %v309 = vadd.f32 0.0, %v308
        %v310 = vpop.f32.mrb[0].mxu0
        %311 = vdwg.mxu0
        %312 = vmatprep.subr.mxu0 0.0
        %v313 = vand.u32 %v229, 4294901760
        %v314 = vsub.f32 %v229, %v313
        %v315 = vand.u32 %v314, 4294901760
        %v316 = vsub.f32 %v314, %v315
        %v317 = vand.u32 %v316, 4294901760
        %318 = vmatpush1.msra.mxu0 %v317
        %319 = vmatprep.subr.mxu0 0.0
        %v320 = vand.u32 %v230, 4294901760
        %v321 = vsub.f32 %v230, %v320
        %v322 = vand.u32 %v321, 4294901760
        %v323 = vsub.f32 %v321, %v322
        %v324 = vand.u32 %v323, 4294901760
        %325 = vmatpush1.msra.mxu0 %v324
        %326 = vmatprep.subr.mxu0 0.0
        %327 = vmatpush1.msra.mxu0 0.0
        %328 = vmatprep.subr.mxu0 0.0
        %329 = vmatpush1.msra.mxu0 0.0
        %330 = vmatprep.subr.mxu0 0.0
        %331 = vmatpush1.msra.mxu0 0.0
        %332 = vmatprep.subr.mxu0 0.0
        %333 = vmatpush1.msra.mxu0 0.0
        %334 = vmatprep.subr.mxu0 0.0
        %335 = vmatpush1.msra.mxu0 0.0
        %336 = vmatprep.subr.mxu0 0.0
        %337 = vmatpush1.msra.mxu0 0.0
        %338 = vmatprep.subr.mxu0 0.0
        %339 = vmatpush1.msra.mxu0 0.0
        %340 = vmatprep.subr.mxu0 0.0
        %341 = vmatpush1.msra.mxu0 0.0
        %342 = vmatprep.subr.mxu0 0.0
        %343 = vmatpush1.msra.mxu0 0.0
        %344 = vmatprep.subr.mxu0 0.0
        %345 = vmatpush1.msra.mxu0 0.0
        %346 = vmatprep.subr.mxu0 0.0
        %347 = vmatpush1.msra.mxu0 0.0
        %348 = vmatprep.subr.mxu0 0.0
        %349 = vmatpush1.msra.mxu0 0.0
        %350 = vmatprep.subr.mxu0 0.0
        %351 = vmatpush1.msra.mxu0 0.0
        %352 = vmatprep.subr.mxu0 0.0
        %353 = vmatpush1.msra.mxu0 0.0
        %354 = vmatprep.subr.mxu0 0.0
        %355 = vmatpush1.msra.mxu0 0.0
        %356 = vmatprep.subr.mxu0 0.0
        %357 = vmatpush1.msra.mxu0 0.0
        %358 = vmatprep.subr.mxu0 0.0
        %359 = vmatpush1.msra.mxu0 0.0
        %360 = vmatprep.subr.mxu0 0.0
        %361 = vmatpush1.msra.mxu0 0.0
        %362 = vmatprep.subr.mxu0 0.0
        %363 = vmatpush1.msra.mxu0 0.0
        %364 = vmatprep.subr.mxu0 0.0
        %365 = vmatpush1.msra.mxu0 0.0
        %366 = vmatprep.subr.mxu0 0.0
        %367 = vmatpush1.msra.mxu0 0.0
        %368 = vmatprep.subr.mxu0 0.0
        %369 = vmatpush1.msra.mxu0 0.0
        %370 = vmatprep.subr.mxu0 0.0
        %371 = vmatpush1.msra.mxu0 0.0
        %372 = vmatprep.subr.mxu0 0.0
        %373 = vmatpush1.msra.mxu0 0.0
        %374 = vmatprep.subr.mxu0 0.0
        %375 = vmatpush1.msra.mxu0 0.0
        %376 = vmatprep.subr.mxu0 0.0
        %377 = vmatpush1.msra.mxu0 0.0
        %378 = vmatprep.subr.mxu0 0.0
        %379 = vmatpush1.msra.mxu0 0.0
        %380 = vmatprep.subr.mxu0 0.0
        %381 = vmatpush1.msra.mxu0 0.0
        %382 = vmatprep.subr.mxu0 0.0
        %383 = vmatpush1.msra.mxu0 0.0
        %384 = vmatprep.subr.mxu0 0.0
        %385 = vmatpush1.msra.mxu0 0.0
        %386 = vmatprep.mubr.f32.mxu0 0.0
        %v387 = vand.u32 %v233, 4294901760
        %388 = vmatmul.mubr.f32.gmra.mrb[0].mxu0 %v387
        %v389 = vpop.f32.mrb[0].mxu0
        %v390 = vadd.f32 %v309, %v389
        %v391 = vpop.f32.mrb[0].mxu0
        %392 = vdwg.mxu0
        %393 = vmatprep.subr.mxu0 0.0
        %v394 = vand.u32 %v229, 4294901760
        %v395 = vsub.f32 %v229, %v394
        %396 = vmatpush1.msra.mxu0 %v395
        %397 = vmatprep.subr.mxu0 0.0
        %v398 = vand.u32 %v230, 4294901760
        %v399 = vsub.f32 %v230, %v398
        %400 = vmatpush1.msra.mxu0 %v399
        %401 = vmatprep.subr.mxu0 0.0
        %402 = vmatpush1.msra.mxu0 0.0
        %403 = vmatprep.subr.mxu0 0.0
        %404 = vmatpush1.msra.mxu0 0.0
        %405 = vmatprep.subr.mxu0 0.0
        %406 = vmatpush1.msra.mxu0 0.0
        %407 = vmatprep.subr.mxu0 0.0
        %408 = vmatpush1.msra.mxu0 0.0
        %409 = vmatprep.subr.mxu0 0.0
        %410 = vmatpush1.msra.mxu0 0.0
        %411 = vmatprep.subr.mxu0 0.0
        %412 = vmatpush1.msra.mxu0 0.0
        %413 = vmatprep.subr.mxu0 0.0
        %414 = vmatpush1.msra.mxu0 0.0
        %415 = vmatprep.subr.mxu0 0.0
        %416 = vmatpush1.msra.mxu0 0.0
        %417 = vmatprep.subr.mxu0 0.0
        %418 = vmatpush1.msra.mxu0 0.0
        %419 = vmatprep.subr.mxu0 0.0
        %420 = vmatpush1.msra.mxu0 0.0
        %421 = vmatprep.subr.mxu0 0.0
        %422 = vmatpush1.msra.mxu0 0.0
        %423 = vmatprep.subr.mxu0 0.0
        %424 = vmatpush1.msra.mxu0 0.0
        %425 = vmatprep.subr.mxu0 0.0
        %426 = vmatpush1.msra.mxu0 0.0
        %427 = vmatprep.subr.mxu0 0.0
        %428 = vmatpush1.msra.mxu0 0.0
        %429 = vmatprep.subr.mxu0 0.0
        %430 = vmatpush1.msra.mxu0 0.0
        %431 = vmatprep.subr.mxu0 0.0
        %432 = vmatpush1.msra.mxu0 0.0
        %433 = vmatprep.subr.mxu0 0.0
        %434 = vmatpush1.msra.mxu0 0.0
        %435 = vmatprep.subr.mxu0 0.0
        %436 = vmatpush1.msra.mxu0 0.0
        %437 = vmatprep.subr.mxu0 0.0
        %438 = vmatpush1.msra.mxu0 0.0
        %439 = vmatprep.subr.mxu0 0.0
        %440 = vmatpush1.msra.mxu0 0.0
        %441 = vmatprep.subr.mxu0 0.0
        %442 = vmatpush1.msra.mxu0 0.0
        %443 = vmatprep.subr.mxu0 0.0
        %444 = vmatpush1.msra.mxu0 0.0
        %445 = vmatprep.subr.mxu0 0.0
        %446 = vmatpush1.msra.mxu0 0.0
        %447 = vmatprep.subr.mxu0 0.0
        %448 = vmatpush1.msra.mxu0 0.0
        %449 = vmatprep.subr.mxu0 0.0
        %450 = vmatpush1.msra.mxu0 0.0
        %451 = vmatprep.subr.mxu0 0.0
        %452 = vmatpush1.msra.mxu0 0.0
        %453 = vmatprep.subr.mxu0 0.0
        %454 = vmatpush1.msra.mxu0 0.0
        %455 = vmatprep.subr.mxu0 0.0
        %456 = vmatpush1.msra.mxu0 0.0
        %457 = vmatprep.subr.mxu0 0.0
        %458 = vmatpush1.msra.mxu0 0.0
        %459 = vmatprep.subr.mxu0 0.0
        %460 = vmatpush1.msra.mxu0 0.0
        %461 = vmatprep.mubr.f32.mxu0 0.0
        %v462 = vand.u32 %v233, 4294901760
        %v463 = vsub.f32 %v233, %v462
        %464 = vmatmul.mubr.f32.gmra.mrb[0].mxu0 %v463
        %v465 = vpop.f32.mrb[0].mxu0
        %v466 = vadd.f32 %v390, %v465
        %v467 = vpop.f32.mrb[0].mxu0
        %468 = vdwg.mxu0
        %469 = vmatprep.subr.mxu0 0.0
        %v470 = vand.u32 %v229, 4294901760
        %471 = vmatpush1.msra.mxu0 %v470
        %472 = vmatprep.subr.mxu0 0.0
        %v473 = vand.u32 %v230, 4294901760
        %474 = vmatpush1.msra.mxu0 %v473
        %475 = vmatprep.subr.mxu0 0.0
        %476 = vmatpush1.msra.mxu0 0.0
        %477 = vmatprep.subr.mxu0 0.0
        %478 = vmatpush1.msra.mxu0 0.0
        %479 = vmatprep.subr.mxu0 0.0
        %480 = vmatpush1.msra.mxu0 0.0
        %481 = vmatprep.subr.mxu0 0.0
        %482 = vmatpush1.msra.mxu0 0.0
        %483 = vmatprep.subr.mxu0 0.0
        %484 = vmatpush1.msra.mxu0 0.0
        %485 = vmatprep.subr.mxu0 0.0
        %486 = vmatpush1.msra.mxu0 0.0
        %487 = vmatprep.subr.mxu0 0.0
        %488 = vmatpush1.msra.mxu0 0.0
        %489 = vmatprep.subr.mxu0 0.0
        %490 = vmatpush1.msra.mxu0 0.0
        %491 = vmatprep.subr.mxu0 0.0
        %492 = vmatpush1.msra.mxu0 0.0
        %493 = vmatprep.subr.mxu0 0.0
        %494 = vmatpush1.msra.mxu0 0.0
        %495 = vmatprep.subr.mxu0 0.0
        %496 = vmatpush1.msra.mxu0 0.0
        %497 = vmatprep.subr.mxu0 0.0
        %498 = vmatpush1.msra.mxu0 0.0
        %499 = vmatprep.subr.mxu0 0.0
        %500 = vmatpush1.msra.mxu0 0.0
        %501 = vmatprep.subr.mxu0 0.0
        %502 = vmatpush1.msra.mxu0 0.0
        %503 = vmatprep.subr.mxu0 0.0
        %504 = vmatpush1.msra.mxu0 0.0
        %505 = vmatprep.subr.mxu0 0.0
        %506 = vmatpush1.msra.mxu0 0.0
        %507 = vmatprep.subr.mxu0 0.0
        %508 = vmatpush1.msra.mxu0 0.0
        %509 = vmatprep.subr.mxu0 0.0
        %510 = vmatpush1.msra.mxu0 0.0
        %511 = vmatprep.subr.mxu0 0.0
        %512 = vmatpush1.msra.mxu0 0.0
        %513 = vmatprep.subr.mxu0 0.0
        %514 = vmatpush1.msra.mxu0 0.0
        %515 = vmatprep.subr.mxu0 0.0
        %516 = vmatpush1.msra.mxu0 0.0
        %517 = vmatprep.subr.mxu0 0.0
        %518 = vmatpush1.msra.mxu0 0.0
        %519 = vmatprep.subr.mxu0 0.0
        %520 = vmatpush1.msra.mxu0 0.0
        %521 = vmatprep.subr.mxu0 0.0
        %522 = vmatpush1.msra.mxu0 0.0
        %523 = vmatprep.subr.mxu0 0.0
        %524 = vmatpush1.msra.mxu0 0.0
        %525 = vmatprep.subr.mxu0 0.0
        %526 = vmatpush1.msra.mxu0 0.0
        %527 = vmatprep.subr.mxu0 0.0
        %528 = vmatpush1.msra.mxu0 0.0
        %529 = vmatprep.subr.mxu0 0.0
        %530 = vmatpush1.msra.mxu0 0.0
        %531 = vmatprep.subr.mxu0 0.0
        %532 = vmatpush1.msra.mxu0 0.0
        %533 = vmatprep.subr.mxu0 0.0
        %534 = vmatpush1.msra.mxu0 0.0
        %535 = vmatprep.mubr.f32.mxu0 0.0
        %v536 = vand.u32 %v233, 4294901760
        %v537 = vsub.f32 %v233, %v536
        %v538 = vand.u32 %v537, 4294901760
        %539 = vmatmul.mubr.f32.gmra.mrb[0].mxu0 %v538
        %v540 = vpop.f32.mrb[0].mxu0
        %v541 = vadd.f32 %v466, %v540
        %v542 = vpop.f32.mrb[0].mxu0
        %543 = vdwg.mxu0
        %544 = vmatprep.subr.mxu0 0.0
        %v545 = vand.u32 %v229, 4294901760
        %v546 = vsub.f32 %v229, %v545
        %v547 = vand.u32 %v546, 4294901760
        %548 = vmatpush1.msra.mxu0 %v547
        %549 = vmatprep.subr.mxu0 0.0
        %v550 = vand.u32 %v230, 4294901760
        %v551 = vsub.f32 %v230, %v550
        %v552 = vand.u32 %v551, 4294901760
        %553 = vmatpush1.msra.mxu0 %v552
        %554 = vmatprep.subr.mxu0 0.0
        %555 = vmatpush1.msra.mxu0 0.0
        %556 = vmatprep.subr.mxu0 0.0
        %557 = vmatpush1.msra.mxu0 0.0
        %558 = vmatprep.subr.mxu0 0.0
        %559 = vmatpush1.msra.mxu0 0.0
        %560 = vmatprep.subr.mxu0 0.0
        %561 = vmatpush1.msra.mxu0 0.0
        %562 = vmatprep.subr.mxu0 0.0
        %563 = vmatpush1.msra.mxu0 0.0
        %564 = vmatprep.subr.mxu0 0.0
        %565 = vmatpush1.msra.mxu0 0.0
        %566 = vmatprep.subr.mxu0 0.0
        %567 = vmatpush1.msra.mxu0 0.0
        %568 = vmatprep.subr.mxu0 0.0
        %569 = vmatpush1.msra.mxu0 0.0
        %570 = vmatprep.subr.mxu0 0.0
        %571 = vmatpush1.msra.mxu0 0.0
        %572 = vmatprep.subr.mxu0 0.0
        %573 = vmatpush1.msra.mxu0 0.0
        %574 = vmatprep.subr.mxu0 0.0
        %575 = vmatpush1.msra.mxu0 0.0
        %576 = vmatprep.subr.mxu0 0.0
        %577 = vmatpush1.msra.mxu0 0.0
        %578 = vmatprep.subr.mxu0 0.0
        %579 = vmatpush1.msra.mxu0 0.0
        %580 = vmatprep.subr.mxu0 0.0
        %581 = vmatpush1.msra.mxu0 0.0
        %582 = vmatprep.subr.mxu0 0.0
        %583 = vmatpush1.msra.mxu0 0.0
        %584 = vmatprep.subr.mxu0 0.0
        %585 = vmatpush1.msra.mxu0 0.0
        %586 = vmatprep.subr.mxu0 0.0
        %587 = vmatpush1.msra.mxu0 0.0
        %588 = vmatprep.subr.mxu0 0.0
        %589 = vmatpush1.msra.mxu0 0.0
        %590 = vmatprep.subr.mxu0 0.0
        %591 = vmatpush1.msra.mxu0 0.0
        %592 = vmatprep.subr.mxu0 0.0
        %593 = vmatpush1.msra.mxu0 0.0
        %594 = vmatprep.subr.mxu0 0.0
        %595 = vmatpush1.msra.mxu0 0.0
        %596 = vmatprep.subr.mxu0 0.0
        %597 = vmatpush1.msra.mxu0 0.0
        %598 = vmatprep.subr.mxu0 0.0
        %599 = vmatpush1.msra.mxu0 0.0
        %600 = vmatprep.subr.mxu0 0.0
        %601 = vmatpush1.msra.mxu0 0.0
        %602 = vmatprep.subr.mxu0 0.0
        %603 = vmatpush1.msra.mxu0 0.0
        %604 = vmatprep.subr.mxu0 0.0
        %605 = vmatpush1.msra.mxu0 0.0
        %606 = vmatprep.subr.mxu0 0.0
        %607 = vmatpush1.msra.mxu0 0.0
        %608 = vmatprep.subr.mxu0 0.0
        %609 = vmatpush1.msra.mxu0 0.0
        %610 = vmatprep.subr.mxu0 0.0
        %611 = vmatpush1.msra.mxu0 0.0
        %612 = vmatprep.subr.mxu0 0.0
        %613 = vmatpush1.msra.mxu0 0.0
        %614 = vmatprep.mubr.f32.mxu0 0.0
        %v615 = vand.u32 %v233, 4294901760
        %616 = vmatmul.mubr.f32.gmra.mrb[0].mxu0 %v615
        %v617 = vpop.f32.mrb[0].mxu0
        %v618 = vadd.f32 %v541, %v617
        %v619 = vpop.f32.mrb[0].mxu0
        %620 = vdwg.mxu0
        %621 = vmatprep.subr.mxu0 0.0
        %v622 = vand.u32 %v229, 4294901760
        %623 = vmatpush1.msra.mxu0 %v622
        %624 = vmatprep.subr.mxu0 0.0
        %v625 = vand.u32 %v230, 4294901760
        %626 = vmatpush1.msra.mxu0 %v625
        %627 = vmatprep.subr.mxu0 0.0
        %628 = vmatpush1.msra.mxu0 0.0
        %629 = vmatprep.subr.mxu0 0.0
        %630 = vmatpush1.msra.mxu0 0.0
        %631 = vmatprep.subr.mxu0 0.0
        %632 = vmatpush1.msra.mxu0 0.0
        %633 = vmatprep.subr.mxu0 0.0
        %634 = vmatpush1.msra.mxu0 0.0
        %635 = vmatprep.subr.mxu0 0.0
        %636 = vmatpush1.msra.mxu0 0.0
        %637 = vmatprep.subr.mxu0 0.0
        %638 = vmatpush1.msra.mxu0 0.0
        %639 = vmatprep.subr.mxu0 0.0
        %640 = vmatpush1.msra.mxu0 0.0
        %641 = vmatprep.subr.mxu0 0.0
        %642 = vmatpush1.msra.mxu0 0.0
        %643 = vmatprep.subr.mxu0 0.0
        %644 = vmatpush1.msra.mxu0 0.0
        %645 = vmatprep.subr.mxu0 0.0
        %646 = vmatpush1.msra.mxu0 0.0
        %647 = vmatprep.subr.mxu0 0.0
        %648 = vmatpush1.msra.mxu0 0.0
        %649 = vmatprep.subr.mxu0 0.0
        %650 = vmatpush1.msra.mxu0 0.0
        %651 = vmatprep.subr.mxu0 0.0
        %652 = vmatpush1.msra.mxu0 0.0
        %653 = vmatprep.subr.mxu0 0.0
        %654 = vmatpush1.msra.mxu0 0.0
        %655 = vmatprep.subr.mxu0 0.0
        %656 = vmatpush1.msra.mxu0 0.0
        %657 = vmatprep.subr.mxu0 0.0
        %658 = vmatpush1.msra.mxu0 0.0
        %659 = vmatprep.subr.mxu0 0.0
        %660 = vmatpush1.msra.mxu0 0.0
        %661 = vmatprep.subr.mxu0 0.0
        %662 = vmatpush1.msra.mxu0 0.0
        %663 = vmatprep.subr.mxu0 0.0
        %664 = vmatpush1.msra.mxu0 0.0
        %665 = vmatprep.subr.mxu0 0.0
        %666 = vmatpush1.msra.mxu0 0.0
        %667 = vmatprep.subr.mxu0 0.0
        %668 = vmatpush1.msra.mxu0 0.0
        %669 = vmatprep.subr.mxu0 0.0
        %670 = vmatpush1.msra.mxu0 0.0
        %671 = vmatprep.subr.mxu0 0.0
        %672 = vmatpush1.msra.mxu0 0.0
        %673 = vmatprep.subr.mxu0 0.0
        %674 = vmatpush1.msra.mxu0 0.0
        %675 = vmatprep.subr.mxu0 0.0
        %676 = vmatpush1.msra.mxu0 0.0
        %677 = vmatprep.subr.mxu0 0.0
        %678 = vmatpush1.msra.mxu0 0.0
        %679 = vmatprep.subr.mxu0 0.0
        %680 = vmatpush1.msra.mxu0 0.0
        %681 = vmatprep.subr.mxu0 0.0
        %682 = vmatpush1.msra.mxu0 0.0
        %683 = vmatprep.subr.mxu0 0.0
        %684 = vmatpush1.msra.mxu0 0.0
        %685 = vmatprep.subr.mxu0 0.0
        %686 = vmatpush1.msra.mxu0 0.0
        %687 = vmatprep.mubr.f32.mxu0 0.0
        %v688 = vand.u32 %v233, 4294901760
        %689 = vmatmul.mubr.f32.gmra.mrb[0].mxu0 %v688
        %v690 = vpop.f32.mrb[0].mxu0
        %v691 = vadd.f32 %v618, %v690
        %v692 = vpop.f32.mrb[0].mxu0
        %693 = vdwg.mxu0
        %v694 = vadd.f32 %v228, %v691
        %vm695 = vcmask 261120
        %696 = vst.msk [vmem:[%s189] sm:$0xff] %vm695, %v694
        %s697 = sand.u32 %s99, 1
        %s698 = scalar_lea.sflag [#allocation3], %s697
        %s699 = sand.u32 %s99, 1
        %s700 = smul.addr %s699, 8
        %s701 = scalar_lea.vmem [#allocation2], %s700
        // Predicated region
        $region33: #{tpu_custom_call.1} parent=27 // pred_check
          %p702 = pneg %p109
        $region34: #{tpu_custom_call.1} parent=27 // pred_check_branch
          %704 = sbr.rel (%p702) target = $region36
        $region35: #{tpu_custom_call.1} parent=27 // pred_region
          %s706 = ssub.s32 128, 128
          %707 = vsyncadd %s698, %s706
          %s708 = smul.addr %s21, 128
          %s709 = scalar_lea.hbm %s2, %s708
          %s711 = sshll.u32 %s701, 4
          %s712 = int_to_ptr.vmem [resolvable:$true] %s711
          %714 = dma.vmem_to_hbm [thread:$0]  %s712, 128, %s709, %s698
        $region36: #{tpu_custom_call.1} parent=27 // pred_fallthru
          _
      $region28: #{tpu_custom_call.1} parent=5 // pred_fallthru
        _
      %p715 = scmp.le.s32.totalorder 2, %s11
      // Predicated region
      $region37: #{tpu_custom_call.1} parent=5 // pred_check
        %p716 = pneg %p715
      $region38: #{tpu_custom_call.1} parent=5 // pred_check_branch
        %718 = sbr.rel (%p716) target = $region40
      $region39: #{tpu_custom_call.1} parent=5 // pred_region
        %s719 = ssub.s32 %s11, 2
        // Predicated region
        $region41: #{tpu_custom_call.1} parent=39 // pred_check
          %p720 = pneg %p115
        $region42: #{tpu_custom_call.1} parent=39 // pred_check_branch
          %722 = sbr.rel (%p720) target = $region44
        $region43: #{tpu_custom_call.1} parent=39 // pred_region
          %s723 = sand.u32 %s100, 1
          %s724 = scalar_lea.sflag [#allocation3], %s723
          %s725 = sand.u32 %s100, 1
          %s726 = smul.addr %s725, 8
          %s727 = scalar_lea.vmem [#allocation2], %s726
          %728 = dma.done %s724, 128
        $region44: #{tpu_custom_call.1} parent=39 // pred_fallthru
          _
      $region40: #{tpu_custom_call.1} parent=5 // pred_fallthru
        _
    $region6: #{tpu_custom_call.1} parent=1 // loop_footer
      %s15 = sadd.s32 1, %s11
    $region7: #{tpu_custom_call.1} parent=1 // loop_footer_branch
      %10 = sbr.rel target = $region3
    $region8: #{tpu_custom_call.1} parent=1 // loop_exit
      _
    %729 = vsyncpa [#allocation3], 1
    %s730 = scalar_lea.sflag [#allocation3], 1
    %731 = vsyncpa %s730, 1

</llo_original>
